<compile_context>
chip_gen: v5e
topology: v5e:2x2
jax: 0.10.0
libtpu: 0.0.40
codegen_flags: <defaults>
</compile_context>

<pallas_src>
import math

import jax
import jax.numpy as jnp
from jax.experimental import pallas as pl
from jax.experimental.pallas import tpu as pltpu

_ALIGN = 16  # bf16-friendly row-tile alignment (sublane packing)


def _leaky_relu(x, slope=0.02):
    return jnp.where(x > 0, x, slope * x)


def _round_up(x, m):
    return ((x + m - 1) // m) * m


# --------------------------- tiling / VMEM plan ------------------------------


def _vmem_plan():
    """Generation-aware plan: (A double-buffer budget, vmem_limit_bytes, tm cap)."""
    try:
        cap = pltpu.get_tpu_info().vmem_capacity_bytes
    except Exception:
        cap = 64 * 1024 * 1024  # conservative fallback (v7x-class)
    if cap >= 100 * 1024 * 1024:                      # v5e / v6e (128 MiB VMEM)
        return 96 * 1024 * 1024, 112 * 1024 * 1024, 1024
    return 24 * 1024 * 1024, 48 * 1024 * 1024, 512    # v7x (64 MiB per TC)


def _pick_tiles(n, row_tile=None, col_tile=None):
    a_budget, vmem_limit, tm_cap = _vmem_plan()
    n16 = _round_up(n, _ALIGN)

    tm = row_tile if row_tile is not None else tm_cap
    tm = max(_ALIGN, (min(tm, n16) // _ALIGN) * _ALIGN)

    if col_tile is not None:
        tk = col_tile
    else:
        # 2 double-buffered bf16 A tiles of (tm, tk): 4 B/elem total budget.
        tk_max = a_budget // (4 * tm)
        if tk_max >= n16:
            tk = n16
        else:
            step = math.lcm(tm, 128)          # multiple of tm and the 128-lane tile
            tk = max(step, (tk_max // step) * step)

    if tk >= n16:
        n_pad = _round_up(n16, tm)
        tk = n_pad                            # single K tile: full-extent block
    else:
        n_pad = _round_up(n16, math.lcm(tm, tk))
    return tm, tk, n_pad, vmem_limit


# ------------------------------ kernels -------------------------------------


def _gcn_layer_kernel(a_ref, hw_ref, b_ref, o_ref, acc_ref):
    """ReLU(A @ (H@W) + b): A streamed in (tm, tk) bf16 tiles, f32 accumulation."""
    k = pl.program_id(1)

    @pl.when(k == 0)
    def _():
        acc_ref[...] = jnp.zeros_like(acc_ref)

    acc_ref[...] += jnp.dot(a_ref[...], hw_ref[...],
                            preferred_element_type=jnp.float32)

    @pl.when(k == pl.num_programs(1) - 1)
    def _():
        o_ref[...] = jnp.maximum(acc_ref[...] + b_ref[...], 0.0).astype(o_ref.dtype)


def _gcn_head_kernel(a_ref, hw_ref, mw1_ref, mb1_ref, mw2_ref, mb2_ref,
                     mw3_ref, mb3_ref, o_ref, acc_ref):
    """Fused conv3 (A@(H@W3), bias folded into mb1) + MLP(leaky 0.02) + log_softmax."""
    k = pl.program_id(1)

    @pl.when(k == 0)
    def _():
        acc_ref[...] = jnp.zeros_like(acc_ref)

    acc_ref[...] += jnp.dot(a_ref[...], hw_ref[...],
                            preferred_element_type=jnp.float32)

    @pl.when(k == pl.num_programs(1) - 1)
    def _():
        h = acc_ref[...]
        h = _leaky_relu(jnp.dot(h, mw1_ref[...],
                                preferred_element_type=jnp.float32) + mb1_ref[...])
        h = _leaky_relu(jnp.dot(h, mw2_ref[...],
                                preferred_element_type=jnp.float32) + mb2_ref[...])
        h = jnp.dot(h, mw3_ref[...],
                    preferred_element_type=jnp.float32) + mb3_ref[...]
        m = jnp.max(h, axis=1, keepdims=True)
        s = h - m
        lse = jnp.log(jnp.sum(jnp.exp(s), axis=1, keepdims=True))
        o_ref[...] = s - lse


# ------------------------------ pallas_call wrappers -------------------------


def _const_spec(shape):
    return pl.BlockSpec(shape, lambda i, k: (0,) * len(shape))


def _compiler_params(vmem_limit):
    return pltpu.CompilerParams(
        dimension_semantics=("parallel", "arbitrary"),  # rows independent, K reduces
        vmem_limit_bytes=vmem_limit,
    )


def _layer_call(a_p, hw_p, b, tm, tk, vmem_limit):
    n_pad = a_p.shape[0]
    fout = hw_p.shape[1]
    grid_spec = pltpu.PrefetchScalarGridSpec(
        num_scalar_prefetch=0,
        grid=(n_pad // tm, n_pad // tk),
        in_specs=[
            pl.BlockSpec((tm, tk), lambda i, k: (i, k)),     # streamed A tile (bf16)
            pl.BlockSpec((tk, fout), lambda i, k: (k, 0)),   # streamed (H@W) K-slice
            _const_spec((1, fout)),                          # bias
        ],
        out_specs=pl.BlockSpec((tm, fout), lambda i, k: (i, 0)),
        scratch_shapes=[pltpu.VMEM((tm, fout), jnp.float32)],
    )
    return pl.pallas_call(
        _gcn_layer_kernel,
        out_shape=jax.ShapeDtypeStruct((n_pad, fout), jnp.bfloat16),
        grid_spec=grid_spec,
        compiler_params=_compiler_params(vmem_limit),
    )(a_p, hw_p, b)


def _head_call(a_p, hw3_p, mw1, mb1_f, mw2, mb2, mw3, mb3, tm, tk, vmem_limit):
    n_pad = a_p.shape[0]
    hid = hw3_p.shape[1]
    c = mw3.shape[1]
    grid_spec = pltpu.PrefetchScalarGridSpec(
        num_scalar_prefetch=0,
        grid=(n_pad // tm, n_pad // tk),
        in_specs=[
            pl.BlockSpec((tm, tk), lambda i, k: (i, k)),
            pl.BlockSpec((tk, hid), lambda i, k: (k, 0)),
            _const_spec(mw1.shape), _const_spec(mb1_f.shape),
            _const_spec(mw2.shape), _const_spec(mb2.shape),
            _const_spec(mw3.shape), _const_spec(mb3.shape),
        ],
        out_specs=pl.BlockSpec((tm, c), lambda i, k: (i, 0)),
        scratch_shapes=[pltpu.VMEM((tm, hid), jnp.float32)],
    )
    return pl.pallas_call(
        _gcn_head_kernel,
        out_shape=jax.ShapeDtypeStruct((n_pad, c), jnp.float32),
        grid_spec=grid_spec,
        compiler_params=_compiler_params(vmem_limit),
    )(a_p, hw3_p, mw1, mb1_f, mw2, mb2, mw3, mb3)


# ------------------------------ forward --------------------------------------


def prepare_gcn_inputs(x, a_norm, row_tile=None, col_tile=None):
    """Pad + bf16-cast the static per-graph operands ONCE (cache the result).

    A is the only O(N^2) operand; re-padding/casting it every forward wastes
    ~1.5-3x the HBM cost of one kernel pass over A, so hoist it here.
    Padded columns of A are zero, so padded rows never pollute real rows.
    """
    n = x.shape[0]
    tm, tk, n_pad, vmem_limit = _pick_tiles(n, row_tile, col_tile)
    a_p = jnp.zeros((n_pad, n_pad), jnp.bfloat16).at[:n, :n].set(
        a_norm.astype(jnp.bfloat16))
    x_p = jnp.zeros((n_pad, x.shape[1]), jnp.bfloat16).at[:n, :].set(
        x.astype(jnp.bfloat16))
    return a_p, x_p, (n, tm, tk, vmem_limit)


def gcn_forward_padded(a_p, x_p, params, n, tm, tk, vmem_limit):
    """Forward on pre-padded bf16 operands (A cached per graph)."""
    (w1, b1, w2, b2, w3, b3, mw1, mb1, mw2, mb2, mw3, mb3) = params
    hi = jax.lax.Precision.HIGHEST

    # Fold conv3 bias into the first MLP bias: (h+b3)@mw1+mb1 == h@mw1+(b3@mw1+mb1)
    mb1_f = jnp.dot(b3, mw1, precision=hi) + mb1

    # lin-then-propagate: H@W is an N x 16 sliver computed by a trivial XLA op.
    hw1 = jnp.dot(x_p.astype(jnp.float32), w1, precision=hi).astype(jnp.bfloat16)
    h1 = _layer_call(a_p, hw1, b1, tm, tk, vmem_limit)

    hw2 = jnp.dot(h1.astype(jnp.float32), w2, precision=hi).astype(jnp.bfloat16)
    h2 = _layer_call(a_p, hw2, b2, tm, tk, vmem_limit)

    hw3 = jnp.dot(h2.astype(jnp.float32), w3, precision=hi).astype(jnp.bfloat16)
    out = _head_call(a_p, hw3, mw1, mb1_f, mw2, mb2, mw3, mb3, tm, tk, vmem_limit)
    return out[:n]


def gcn_forward(x, a_norm, params, row_tile=None, col_tile=None):
    """Convenience path (re-pads A each call; prefer prepare_gcn_inputs + cache)."""
    a_p, x_p, meta = prepare_gcn_inputs(x, a_norm, row_tile, col_tile)
    return gcn_forward_padded(a_p, x_p, params, *meta)


# --------------------------- graph / params / reference ----------------------


def build_norm_adj(edge_index, num_nodes):
    """Dense PyG gcn_norm: D^{-1/2}(A_hat)D^{-1/2}, row i = target, col j = source.

    Parallel edges sum (multigraph); existing self-loops are replaced by a single
    unit loop and missing ones are added (add_remaining_self_loops, fill=1).
    """
    src, dst = edge_index[0], edge_index[1]
    a = jnp.zeros((num_nodes, num_nodes), jnp.float32).at[dst, src].add(1.0)
    eye = jnp.eye(num_nodes, dtype=jnp.float32)
    a = a * (1.0 - eye) + eye
    deg = jnp.sum(a, axis=1)
    dinv = jnp.where(deg > 0, 1.0 / jnp.sqrt(deg), 0.0)
    return dinv[:, None] * a * dinv[None, :]


def init_params(key, num_features, num_classes):
    dims = [(num_features, 16), (16, 16), (16, 16),          # GCNConv 1..3
            (16, 64), (64, 16), (16, num_classes)]           # MLP
    params = []
    for (fi, fo) in dims:
        key, kw, kb = jax.random.split(key, 3)
        scale = 1.0 / jnp.sqrt(jnp.float32(fi))
        w = jax.random.uniform(kw, (fi, fo), jnp.float32, -scale, scale)
        b = jax.random.uniform(kb, (1, fo), jnp.float32, -scale, scale)
        params += [w, b]
    return tuple(params)


def gcn_reference(x, a_norm, params):
    """Pure-JAX reference mirroring the kernels' bf16 quantization of A / H@W / H."""
    (w1, b1, w2, b2, w3, b3, mw1, mb1, mw2, mb2, mw3, mb3) = params
    hi = jax.lax.Precision.HIGHEST

    def q(v):
        return v.astype(jnp.bfloat16).astype(jnp.float32)

    a = q(a_norm)

    def agg(h, w):                       # A @ (H @ W) with the kernel's casts
        return jnp.dot(a, q(jnp.dot(q(h), w, precision=hi)), precision=hi)

    h = q(jnp.maximum(agg(x, w1) + b1, 0.0))
    h = q(jnp.maximum(agg(h, w2) + b2, 0.0))
    h = agg(h, w3) + b3
    h = _leaky_relu(jnp.dot(h, mw1, precision=hi) + mb1)
    h = _leaky_relu(jnp.dot(h, mw2, precision=hi) + mb2)
    h = jnp.dot(h, mw3, precision=hi) + mb3
    return jax.nn.log_softmax(h, axis=1)


# ------------------------------------ main -----------------------------------


if __name__ == "__main__":
    key = jax.random.PRNGKey(0)
    num_features, num_classes = 8, 3

    def make_graph(k, n, e):
        kx, ks, kd = jax.random.split(k, 3)
        xx = jax.random.normal(kx, (n, num_features), jnp.float32)
        src = jax.random.randint(ks, (e,), 0, n, dtype=jnp.int32)
        dst = jax.random.randint(kd, (e,), 0, n, dtype=jnp.int32)
        return xx, jnp.stack([src, dst])

    k_g1, k_g2, k_p = jax.random.split(key, 3)
    params = init_params(k_p, num_features, num_classes)

    def check(out, ref, n):
        assert out.shape == (n, num_classes)
        assert bool(jnp.all(jnp.isfinite(out)))
        assert bool(jnp.allclose(jnp.sum(jnp.exp(out), axis=1), 1.0, atol=1e-5))
        assert bool(jnp.allclose(out, ref, atol=5e-3, rtol=5e-3))

    # Graph 1: N=48 -- multi-row-tile and auto-tile paths (single K tile).
    x1, ei1 = make_graph(k_g1, 48, 160)
    a1 = build_norm_adj(ei1, 48)
    ref1 = gcn_reference(x1, a1, params)

    # Hoisted/cached padded bf16 A: pad once, reuse across forward calls.
    a_p, x_p, meta = prepare_gcn_inputs(x1, a1, row_tile=16)
    fwd = jax.jit(lambda a, xp, p: gcn_forward_padded(a, xp, p, *meta))
    out = jax.block_until_ready(fwd(a_p, x_p, params))
    check(out, ref1, 48)
    out = jax.block_until_ready(fwd(a_p, x_p, params))   # 2nd call: no re-pad/cast of A
    check(out, ref1, 48)

    # Auto-sized tiles (single row + single K tile at this N).
    out = jax.block_until_ready(gcn_forward(x1, a1, params))
    check(out, ref1, 48)

    # Graph 2: N=200 -- exercises the K-tiled accumulator path (grid (4, 2)).
    x2, ei2 = make_graph(k_g2, 200, 600)
    a2 = build_norm_adj(ei2, 200)
    ref2 = gcn_reference(x2, a2, params)
    out2 = jax.block_until_ready(
        gcn_forward(x2, a2, params, row_tile=64, col_tile=128))
    check(out2, ref2, 200)

    print("KERNEL_OK")
</pallas_src>

<mosaic_0001>
module attributes {stable_mosaic.version = 11 : i64} {
  func.func @_gcn_head_kernel(%arg0: i32, %arg1: i32, %arg2: memref<16x48xbf16, #tpu.memory_space<vmem>>, %arg3: memref<48x16xbf16, #tpu.memory_space<vmem>>, %arg4: memref<16x64xf32, #tpu.memory_space<vmem>>, %arg5: memref<1x64xf32, #tpu.memory_space<vmem>>, %arg6: memref<64x16xf32, #tpu.memory_space<vmem>>, %arg7: memref<1x16xf32, #tpu.memory_space<vmem>>, %arg8: memref<16x3xf32, #tpu.memory_space<vmem>>, %arg9: memref<1x3xf32, #tpu.memory_space<vmem>>, %arg10: memref<16x3xf32, #tpu.memory_space<vmem>>, %arg11: memref<16x16xf32, #tpu.memory_space<vmem>>) attributes {dimension_semantics = [#tpu.dimension_semantics<parallel>, #tpu.dimension_semantics<arbitrary>], iteration_bounds = array<i64: 3, 1>, scalar_prefetch = 0 : i64, scratch_operands = 1 : i64, tpu.core_type = #tpu.core_type<tc>, window_params = [{transform_indices = @transform_0, window_bounds = array<i64: 16, 48>}, {transform_indices = @transform_1, window_bounds = array<i64: 48, 16>}, {pipeline_mode = #tpu.pipeline_mode<synchronous>, transform_indices = @transform_2, window_bounds = array<i64: 16, 64>}, {pipeline_mode = #tpu.pipeline_mode<synchronous>, transform_indices = @transform_3, window_bounds = array<i64: 1, 64>}, {pipeline_mode = #tpu.pipeline_mode<synchronous>, transform_indices = @transform_4, window_bounds = array<i64: 64, 16>}, {pipeline_mode = #tpu.pipeline_mode<synchronous>, transform_indices = @transform_5, window_bounds = array<i64: 1, 16>}, {pipeline_mode = #tpu.pipeline_mode<synchronous>, transform_indices = @transform_6, window_bounds = array<i64: 16, 3>}, {pipeline_mode = #tpu.pipeline_mode<synchronous>, transform_indices = @transform_7, window_bounds = array<i64: 1, 3>}, {transform_indices = @transform_8, window_bounds = array<i64: 16, 3>}]} {
    %c0_i32 = arith.constant 0 : i32
    %0 = arith.cmpi eq, %arg1, %c0_i32 : i32
    %1 = arith.extui %0 : i1 to i32
    %c0_i32_0 = arith.constant 0 : i32
    %2 = arith.cmpi ne, %1, %c0_i32_0 : i32
    scf.if %2 {
      %cst_10 = arith.constant 0.000000e+00 : f32
      %12 = vector.broadcast %cst_10 : f32 to vector<16x16xf32>
      %c0_11 = arith.constant 0 : index
      %c0_12 = arith.constant 0 : index
      %13 = vector.load %arg11[%c0_11, %c0_12] : memref<16x16xf32, #tpu.memory_space<vmem>>, vector<16x16xf32>
      tpu.vector_store %arg11[%c0_11, %c0_12], %12 {strides = array<i32>} : memref<16x16xf32, #tpu.memory_space<vmem>>, vector<16x16xf32>,
    } else {
    }
    %c0 = arith.constant 0 : index
    %c0_1 = arith.constant 0 : index
    %3 = vector.load %arg11[%c0, %c0_1] : memref<16x16xf32, #tpu.memory_space<vmem>>, vector<16x16xf32>
    %c0_2 = arith.constant 0 : index
    %c0_3 = arith.constant 0 : index
    %4 = vector.load %arg2[%c0_2, %c0_3] : memref<16x48xbf16, #tpu.memory_space<vmem>>, vector<16x48xbf16>
    %c0_4 = arith.constant 0 : index
    %c0_5 = arith.constant 0 : index
    %5 = vector.load %arg3[%c0_4, %c0_5] : memref<48x16xbf16, #tpu.memory_space<vmem>>, vector<48x16xbf16>
    %cst = arith.constant dense<0.000000e+00> : vector<16x16xf32>
    %6 = tpu.matmul %4, %5, %cst {dimension_numbers = #tpu.dot_dimension_numbers<[1], [0], [0], [1], [0, 0, 1, 1], [], []>} : vector<16x48xbf16>, vector<48x16xbf16>, vector<16x16xf32> -> vector<16x16xf32>
    %7 = arith.addf %3, %6 : vector<16x16xf32>
    %c0_6 = arith.constant 0 : index
    %c0_7 = arith.constant 0 : index
    %8 = vector.load %arg11[%c0_6, %c0_7] : memref<16x16xf32, #tpu.memory_space<vmem>>, vector<16x16xf32>
    tpu.vector_store %arg11[%c0_6, %c0_7], %7 {strides = array<i32>} : memref<16x16xf32, #tpu.memory_space<vmem>>, vector<16x16xf32>,
    %c0_i32_8 = arith.constant 0 : i32
    %9 = arith.cmpi eq, %arg1, %c0_i32_8 : i32
    %10 = arith.extui %9 : i1 to i32
    %c0_i32_9 = arith.constant 0 : i32
    %11 = arith.cmpi ne, %10, %c0_i32_9 : i32
    scf.if %11 {
      %c0_10 = arith.constant 0 : index
      %c0_11 = arith.constant 0 : index
      %12 = vector.load %arg11[%c0_10, %c0_11] : memref<16x16xf32, #tpu.memory_space<vmem>>, vector<16x16xf32>
      %c0_12 = arith.constant 0 : index
      %c0_13 = arith.constant 0 : index
      %13 = vector.load %arg4[%c0_12, %c0_13] : memref<16x64xf32, #tpu.memory_space<vmem>>, vector<16x64xf32>
      %cst_14 = arith.constant dense<0.000000e+00> : vector<16x64xf32>
      %14 = tpu.matmul %12, %13, %cst_14 {dimension_numbers = #tpu.dot_dimension_numbers<[1], [0], [0], [1], [0, 0, 1, 1], [], []>} : vector<16x16xf32>, vector<16x64xf32>, vector<16x64xf32> -> vector<16x64xf32>
      %c0_15 = arith.constant 0 : index
      %c0_16 = arith.constant 0 : index
      %15 = vector.load %arg5[%c0_15, %c0_16] : memref<1x64xf32, #tpu.memory_space<vmem>>, vector<1x64xf32>
      %16 = vector.broadcast %15 : vector<1x64xf32> to vector<16x64xf32>
      %17 = arith.addf %14, %16 : vector<16x64xf32>
      %cst_17 = arith.constant 0.000000e+00 : f32
      %18 = vector.broadcast %cst_17 : f32 to vector<16x64xf32>
      %19 = arith.cmpf ogt, %17, %18 : vector<16x64xf32>
      %cst_18 = arith.constant 2.000000e-02 : f32
      %20 = vector.broadcast %cst_18 : f32 to vector<16x64xf32>
      %21 = arith.mulf %20, %17 : vector<16x64xf32>
      %22 = arith.select %19, %17, %21 : vector<16x64xi1>, vector<16x64xf32>
      %c0_19 = arith.constant 0 : index
      %c0_20 = arith.constant 0 : index
      %23 = vector.load %arg6[%c0_19, %c0_20] : memref<64x16xf32, #tpu.memory_space<vmem>>, vector<64x16xf32>
      %cst_21 = arith.constant dense<0.000000e+00> : vector<16x16xf32>
      %24 = tpu.matmul %22, %23, %cst_21 {dimension_numbers = #tpu.dot_dimension_numbers<[1], [0], [0], [1], [0, 0, 1, 1], [], []>} : vector<16x64xf32>, vector<64x16xf32>, vector<16x16xf32> -> vector<16x16xf32>
      %c0_22 = arith.constant 0 : index
      %c0_23 = arith.constant 0 : index
      %25 = vector.load %arg7[%c0_22, %c0_23] : memref<1x16xf32, #tpu.memory_space<vmem>>, vector<1x16xf32>
      %26 = vector.broadcast %25 : vector<1x16xf32> to vector<16x16xf32>
      %27 = arith.addf %24, %26 : vector<16x16xf32>
      %cst_24 = arith.constant 0.000000e+00 : f32
      %28 = vector.broadcast %cst_24 : f32 to vector<16x16xf32>
      %29 = arith.cmpf ogt, %27, %28 : vector<16x16xf32>
      %cst_25 = arith.constant 2.000000e-02 : f32
      %30 = vector.broadcast %cst_25 : f32 to vector<16x16xf32>
      %31 = arith.mulf %30, %27 : vector<16x16xf32>
      %32 = arith.select %29, %27, %31 : vector<16x16xi1>, vector<16x16xf32>
      %c0_26 = arith.constant 0 : index
      %c0_27 = arith.constant 0 : index
      %33 = vector.load %arg8[%c0_26, %c0_27] : memref<16x3xf32, #tpu.memory_space<vmem>>, vector<16x3xf32>
      %cst_28 = arith.constant dense<0.000000e+00> : vector<16x3xf32>
      %34 = tpu.matmul %32, %33, %cst_28 {dimension_numbers = #tpu.dot_dimension_numbers<[1], [0], [0], [1], [0, 0, 1, 1], [], []>} : vector<16x16xf32>, vector<16x3xf32>, vector<16x3xf32> -> vector<16x3xf32>
      %c0_29 = arith.constant 0 : index
      %c0_30 = arith.constant 0 : index
      %35 = vector.load %arg9[%c0_29, %c0_30] : memref<1x3xf32, #tpu.memory_space<vmem>>, vector<1x3xf32>
      %36 = vector.broadcast %35 : vector<1x3xf32> to vector<16x3xf32>
      %37 = arith.addf %34, %36 : vector<16x3xf32>
      %cst_31 = arith.constant dense<0xFF800000> : vector<16xf32>
      %38 = vector.multi_reduction <maximumf>, %37, %cst_31 [1] : vector<16x3xf32> to vector<16xf32>
      %39 = vector.shape_cast %38 : vector<16xf32> to vector<16x1xf32>
      %40 = vector.broadcast %39 : vector<16x1xf32> to vector<16x3xf32>
      %41 = arith.subf %37, %40 : vector<16x3xf32>
      %42 = math.exp %41 : vector<16x3xf32>
      %cst_32 = arith.constant dense<0.000000e+00> : vector<16xf32>
      %43 = vector.multi_reduction <add>, %42, %cst_32 [1] : vector<16x3xf32> to vector<16xf32>
      %44 = vector.shape_cast %43 : vector<16xf32> to vector<16x1xf32>
      %45 = math.log %44 : vector<16x1xf32>
      %46 = vector.broadcast %45 : vector<16x1xf32> to vector<16x3xf32>
      %47 = arith.subf %41, %46 : vector<16x3xf32>
      %c0_33 = arith.constant 0 : index
      %c0_34 = arith.constant 0 : index
      %48 = vector.load %arg10[%c0_33, %c0_34] : memref<16x3xf32, #tpu.memory_space<vmem>>, vector<16x3xf32>
      tpu.vector_store %arg10[%c0_33, %c0_34], %47 {strides = array<i32>} : memref<16x3xf32, #tpu.memory_space<vmem>>, vector<16x3xf32>,
    } else {
    }
    return
  }
  func.func @transform_0(%arg0: i32, %arg1: i32) -> (i32, i32) {
    %c0_i32 = arith.constant 0 : i32
    return %arg0, %arg1 : i32, i32
  }
  func.func @transform_1(%arg0: i32, %arg1: i32) -> (i32, i32) {
    %c0_i32 = arith.constant 0 : i32
    %c0_i32_0 = arith.constant 0 : i32
    return %arg1, %c0_i32 : i32, i32
  }
  func.func @transform_2(%arg0: i32, %arg1: i32) -> (i32, i32) {
    %c0_i32 = arith.constant 0 : i32
    %c0_i32_0 = arith.constant 0 : i32
    %c0_i32_1 = arith.constant 0 : i32
    return %c0_i32, %c0_i32_0 : i32, i32
  }
  func.func @transform_3(%arg0: i32, %arg1: i32) -> (i32, i32) {
    %c0_i32 = arith.constant 0 : i32
    %c0_i32_0 = arith.constant 0 : i32
    %c0_i32_1 = arith.constant 0 : i32
    return %c0_i32, %c0_i32_0 : i32, i32
  }
  func.func @transform_4(%arg0: i32, %arg1: i32) -> (i32, i32) {
    %c0_i32 = arith.constant 0 : i32
    %c0_i32_0 = arith.constant 0 : i32
    %c0_i32_1 = arith.constant 0 : i32
    return %c0_i32, %c0_i32_0 : i32, i32
  }
  func.func @transform_5(%arg0: i32, %arg1: i32) -> (i32, i32) {
    %c0_i32 = arith.constant 0 : i32
    %c0_i32_0 = arith.constant 0 : i32
    %c0_i32_1 = arith.constant 0 : i32
    return %c0_i32, %c0_i32_0 : i32, i32
  }
  func.func @transform_6(%arg0: i32, %arg1: i32) -> (i32, i32) {
    %c0_i32 = arith.constant 0 : i32
    %c0_i32_0 = arith.constant 0 : i32
    %c0_i32_1 = arith.constant 0 : i32
    return %c0_i32, %c0_i32_0 : i32, i32
  }
  func.func @transform_7(%arg0: i32, %arg1: i32) -> (i32, i32) {
    %c0_i32 = arith.constant 0 : i32
    %c0_i32_0 = arith.constant 0 : i32
    %c0_i32_1 = arith.constant 0 : i32
    return %c0_i32, %c0_i32_0 : i32, i32
  }
  func.func @transform_8(%arg0: i32, %arg1: i32) -> (i32, i32) {
    %c0_i32 = arith.constant 0 : i32
    %c0_i32_0 = arith.constant 0 : i32
    return %arg0, %c0_i32 : i32, i32
  }
}

module attributes {stable_mosaic.version = 11 : i64} {
  func.func @_gcn_layer_kernel(%arg0: i32, %arg1: i32, %arg2: memref<16x48xbf16, #tpu.memory_space<vmem>>, %arg3: memref<48x16xbf16, #tpu.memory_space<vmem>>, %arg4: memref<1x16xf32, #tpu.memory_space<vmem>>, %arg5: memref<16x16xbf16, #tpu.memory_space<vmem>>, %arg6: memref<16x16xf32, #tpu.memory_space<vmem>>) attributes {dimension_semantics = [#tpu.dimension_semantics<parallel>, #tpu.dimension_semantics<arbitrary>], iteration_bounds = array<i64: 3, 1>, scalar_prefetch = 0 : i64, scratch_operands = 1 : i64, tpu.core_type = #tpu.core_type<tc>, window_params = [{transform_indices = @transform_0, window_bounds = array<i64: 16, 48>}, {transform_indices = @transform_1, window_bounds = array<i64: 48, 16>}, {pipeline_mode = #tpu.pipeline_mode<synchronous>, transform_indices = @transform_2, window_bounds = array<i64: 1, 16>}, {transform_indices = @transform_3, window_bounds = array<i64: 16, 16>}]} {
    %c0_i32 = arith.constant 0 : i32
    %0 = arith.cmpi eq, %arg1, %c0_i32 : i32
    %1 = arith.extui %0 : i1 to i32
    %c0_i32_0 = arith.constant 0 : i32
    %2 = arith.cmpi ne, %1, %c0_i32_0 : i32
    scf.if %2 {
      %cst_10 = arith.constant 0.000000e+00 : f32
      %12 = vector.broadcast %cst_10 : f32 to vector<16x16xf32>
      %c0_11 = arith.constant 0 : index
      %c0_12 = arith.constant 0 : index
      %13 = vector.load %arg6[%c0_11, %c0_12] : memref<16x16xf32, #tpu.memory_space<vmem>>, vector<16x16xf32>
      tpu.vector_store %arg6[%c0_11, %c0_12], %12 {strides = array<i32>} : memref<16x16xf32, #tpu.memory_space<vmem>>, vector<16x16xf32>,
    } else {
    }
    %c0 = arith.constant 0 : index
    %c0_1 = arith.constant 0 : index
    %3 = vector.load %arg6[%c0, %c0_1] : memref<16x16xf32, #tpu.memory_space<vmem>>, vector<16x16xf32>
    %c0_2 = arith.constant 0 : index
    %c0_3 = arith.constant 0 : index
    %4 = vector.load %arg2[%c0_2, %c0_3] : memref<16x48xbf16, #tpu.memory_space<vmem>>, vector<16x48xbf16>
    %c0_4 = arith.constant 0 : index
    %c0_5 = arith.constant 0 : index
    %5 = vector.load %arg3[%c0_4, %c0_5] : memref<48x16xbf16, #tpu.memory_space<vmem>>, vector<48x16xbf16>
    %cst = arith.constant dense<0.000000e+00> : vector<16x16xf32>
    %6 = tpu.matmul %4, %5, %cst {dimension_numbers = #tpu.dot_dimension_numbers<[1], [0], [0], [1], [0, 0, 1, 1], [], []>} : vector<16x48xbf16>, vector<48x16xbf16>, vector<16x16xf32> -> vector<16x16xf32>
    %7 = arith.addf %3, %6 : vector<16x16xf32>
    %c0_6 = arith.constant 0 : index
    %c0_7 = arith.constant 0 : index
    %8 = vector.load %arg6[%c0_6, %c0_7] : memref<16x16xf32, #tpu.memory_space<vmem>>, vector<16x16xf32>
    tpu.vector_store %arg6[%c0_6, %c0_7], %7 {strides = array<i32>} : memref<16x16xf32, #tpu.memory_space<vmem>>, vector<16x16xf32>,
    %c0_i32_8 = arith.constant 0 : i32
    %9 = arith.cmpi eq, %arg1, %c0_i32_8 : i32
    %10 = arith.extui %9 : i1 to i32
    %c0_i32_9 = arith.constant 0 : i32
    %11 = arith.cmpi ne, %10, %c0_i32_9 : i32
    scf.if %11 {
      %c0_10 = arith.constant 0 : index
      %c0_11 = arith.constant 0 : index
      %12 = vector.load %arg6[%c0_10, %c0_11] : memref<16x16xf32, #tpu.memory_space<vmem>>, vector<16x16xf32>
      %c0_12 = arith.constant 0 : index
      %c0_13 = arith.constant 0 : index
      %13 = vector.load %arg4[%c0_12, %c0_13] : memref<1x16xf32, #tpu.memory_space<vmem>>, vector<1x16xf32>
      %14 = vector.broadcast %13 : vector<1x16xf32> to vector<16x16xf32>
      %15 = arith.addf %12, %14 : vector<16x16xf32>
      %cst_14 = arith.constant 0.000000e+00 : f32
      %16 = vector.broadcast %cst_14 : f32 to vector<16x16xf32>
      %17 = arith.maximumf %15, %16 : vector<16x16xf32>
      %18 = arith.truncf %17 : vector<16x16xf32> to vector<16x16xbf16>
      %c0_15 = arith.constant 0 : index
      %c0_16 = arith.constant 0 : index
      %19 = vector.load %arg5[%c0_15, %c0_16] : memref<16x16xbf16, #tpu.memory_space<vmem>>, vector<16x16xbf16>
      tpu.vector_store %arg5[%c0_15, %c0_16], %18 {strides = array<i32>} : memref<16x16xbf16, #tpu.memory_space<vmem>>, vector<16x16xbf16>,
    } else {
    }
    return
  }
  func.func @transform_0(%arg0: i32, %arg1: i32) -> (i32, i32) {
    %c0_i32 = arith.constant 0 : i32
    return %arg0, %arg1 : i32, i32
  }
  func.func @transform_1(%arg0: i32, %arg1: i32) -> (i32, i32) {
    %c0_i32 = arith.constant 0 : i32
    %c0_i32_0 = arith.constant 0 : i32
    return %arg1, %c0_i32 : i32, i32
  }
  func.func @transform_2(%arg0: i32, %arg1: i32) -> (i32, i32) {
    %c0_i32 = arith.constant 0 : i32
    %c0_i32_0 = arith.constant 0 : i32
    %c0_i32_1 = arith.constant 0 : i32
    return %c0_i32, %c0_i32_0 : i32, i32
  }
  func.func @transform_3(%arg0: i32, %arg1: i32) -> (i32, i32) {
    %c0_i32 = arith.constant 0 : i32
    %c0_i32_0 = arith.constant 0 : i32
    return %arg0, %c0_i32 : i32, i32
  }
}

</mosaic_0001>

<llo_original>
// kernel: _lambda_.3
$region0: #{_lambda_.3}
  #allocation0 [shape = 'u32[]', space=smem, size = 0x4, offset = 0x4, fixed_abs, tag = 'smem constant byte address 0x4 - core index']
  #allocation1 [shape = 'u32[72,128]{1,0:T(1,128)}', space=vmem, size = 0x9000, scoped, tag = 'internal scratch']
  #allocation2 [shape = 'f32[16,16]{1,0:T(8,128)}', space=vmem, size = 0x2000, scoped, tag = 'scratch operand']
  %s0 = inlined_call_operand.vmem [shape: bf16[48,48], index: 0, kind: input, shape index: {}]
  %s1 = inlined_call_operand.vmem [shape: bf16[48,16], index: 1, kind: input, shape index: {}]
  %s2 = inlined_call_operand.vmem [shape: f32[1,16], index: 2, kind: input, shape index: {}]
  %s3 = inlined_call_operand.vmem [shape: bf16[48,16], index: 3, kind: output, shape index: {}]
  %s4 = sld [smem:[#allocation0]]
  $region53: #{_lambda_.3} parent=0
    _
  %s6 = ssub.s32 1, %s4
  %s7 = scalar_select 0, %s6, %s4
  loop: start=0, step=1, limit=5
  $region2: #{_lambda_.3} parent=0 // loop_pre_header
    _
  $region3: #{_lambda_.3} parent=0 // loop_header
    %s9 = sphi 0, %s13
    %p10 = scmp.ge.s32.totalorder %s9, 5
    %s16 = sphi 0, %s28
    %s17 = sphi 0, %s24
    %s18 = sphi 0, %s16
    %s19 = sphi 0, %s17
    %s20 = sphi 0, %s18
    %s21 = sphi 0, %s19
    %s33 = sphi 0, %s35
    %s36 = sphi 0, %s33
    %s37 = sphi 0, %s36
    %s53 = sphi 0, %s37
    %s59 = sphi 0, %s61
    %s62 = sphi 0, %s59
    %s63 = sphi 0, %s62
    %s79 = sphi 0, %s63
    %s83 = sphi 0, %s83
    %s85 = sphi 0, %s83
    %s86 = sphi 0, %s85
    %s100 = sphi 0, %s86
    %s106 = sphi 0, %s108
    %s109 = sphi 0, %s106
    %s110 = sphi 0, %s109
    %s126 = sphi 0, %s110
  $region4: #{_lambda_.3} parent=0 // loop_header_branch
    %12 = sbr.rel (%p10) target = $region8
  $region5: #{_lambda_.3} parent=0 // loop_body
    %s14 = ssub.s32 %s9, 1
    %s15 = ssub.s32 %s9, 2
    %s22 = sadd.s32 1, %s17
    %p23 = scmp.ge.s32.totalorder %s22, 1
    %s24 = scalar_select %p23, 0, %s22
    %s25 = sadd.s32 1, %s16
    %s26 = scalar_select %p23, %s25, %s16
    %p27 = scmp.ge.s32.totalorder %s26, 3
    %s28 = scalar_select %p27, 0, %s26
    %s29 = ssub.s32 %s16, %s28
    %s30 = ssub.s32 %s17, %s24
    %s31 = sor.u32 %s29, %s30
    %p32 = scmp.eq.s32.totalorder %s31, 0
    %s34 = sadd.s32 %s33, 1
    %s35 = scalar_select %p32, %s33, %s34
    %p38 = pneg %p32
    %p39 = scmp.eq.s32.totalorder %s9, 2
    %p40 = por %p38, %p39
    %p41 = scmp.ne.s32.totalorder %s33, %s36
    %p42 = scmp.eq.s32.totalorder %s9, 0
    %p43 = por %p41, %p42
    %p44 = scmp.ne.s32.totalorder %s33, %s36
    %p45 = scmp.eq.s32.totalorder %s14, 2
    %p46 = por %p44, %p45
    %p47 = scmp.ne.s32.totalorder %s36, %s37
    %p48 = scmp.eq.s32.totalorder %s14, 0
    %p49 = por %p47, %p48
    %p50 = scmp.ne.s32.totalorder %s36, %s37
    %p51 = scmp.eq.s32.totalorder %s15, 2
    %p52 = por %p50, %p51
    %p54 = scmp.ne.s32.totalorder %s37, %s53
    %p55 = scmp.eq.s32.totalorder %s15, 0
    %p56 = por %p54, %p55
    %s57 = ssub.s32 %s17, %s24
    %p58 = scmp.eq.s32.totalorder %s57, 0
    %s60 = sadd.s32 %s59, 1
    %s61 = scalar_select %p58, %s59, %s60
    %p64 = pneg %p58
    %p65 = scmp.eq.s32.totalorder %s9, 2
    %p66 = por %p64, %p65
    %p67 = scmp.ne.s32.totalorder %s59, %s62
    %p68 = scmp.eq.s32.totalorder %s9, 0
    %p69 = por %p67, %p68
    %p70 = scmp.ne.s32.totalorder %s59, %s62
    %p71 = scmp.eq.s32.totalorder %s14, 2
    %p72 = por %p70, %p71
    %p73 = scmp.ne.s32.totalorder %s62, %s63
    %p74 = scmp.eq.s32.totalorder %s14, 0
    %p75 = por %p73, %p74
    %p76 = scmp.ne.s32.totalorder %s62, %s63
    %p77 = scmp.eq.s32.totalorder %s15, 2
    %p78 = por %p76, %p77
    %p80 = scmp.ne.s32.totalorder %s63, %s79
    %p81 = scmp.eq.s32.totalorder %s15, 0
    %p82 = por %p80, %p81
    %s84 = sadd.s32 %s83, 1
    %p87 = scmp.eq.s32.totalorder %s9, 2
    %p88 = scmp.ne.s32.totalorder %s83, %s85
    %p89 = scmp.eq.s32.totalorder %s9, 0
    %p90 = por %p88, %p89
    %p91 = scmp.ne.s32.totalorder %s83, %s85
    %p92 = scmp.eq.s32.totalorder %s14, 2
    %p93 = por %p91, %p92
    %p94 = scmp.ne.s32.totalorder %s85, %s86
    %p95 = scmp.eq.s32.totalorder %s14, 0
    %p96 = por %p94, %p95
    %p97 = scmp.ne.s32.totalorder %s85, %s86
    %p98 = scmp.eq.s32.totalorder %s15, 2
    %p99 = por %p97, %p98
    %p101 = scmp.ne.s32.totalorder %s86, %s100
    %p102 = scmp.eq.s32.totalorder %s15, 0
    %p103 = por %p101, %p102
    %s104 = ssub.s32 %s16, %s28
    %p105 = scmp.eq.s32.totalorder %s104, 0
    %s107 = sadd.s32 %s106, 1
    %s108 = scalar_select %p105, %s106, %s107
    %p111 = pneg %p105
    %p112 = scmp.eq.s32.totalorder %s9, 2
    %p113 = por %p111, %p112
    %p114 = scmp.ne.s32.totalorder %s106, %s109
    %p115 = scmp.eq.s32.totalorder %s9, 0
    %p116 = por %p114, %p115
    %p117 = scmp.ne.s32.totalorder %s106, %s109
    %p118 = scmp.eq.s32.totalorder %s14, 2
    %p119 = por %p117, %p118
    %p120 = scmp.ne.s32.totalorder %s109, %s110
    %p121 = scmp.eq.s32.totalorder %s14, 0
    %p122 = por %p120, %p121
    %p123 = scmp.ne.s32.totalorder %s109, %s110
    %p124 = scmp.eq.s32.totalorder %s15, 2
    %p125 = por %p123, %p124
    %p127 = scmp.ne.s32.totalorder %s110, %s126
    %p128 = scmp.eq.s32.totalorder %s15, 0
    %p129 = por %p127, %p128
    %p130 = scmp.le.s32.totalorder 1, %s9
    %p131 = scmp.lt.s32.totalorder %s9, 4
    %p132 = pnand %p130, %p131
    %p133 = pneg %p132
    // Predicated region
    $region9: #{_lambda_.3} parent=5 // pred_check
      _
    $region10: #{_lambda_.3} parent=5 // pred_check_branch
      %135 = sbr.rel (%p132) target = $region12
    $region11: #{_lambda_.3} parent=5 // pred_region
      %s136 = ssub.s32 %s9, 1
      // Predicated region
      $region13: #{_lambda_.3} parent=11 // pred_check
        %p137 = pneg %p75
      $region14: #{_lambda_.3} parent=11 // pred_check_branch
        %139 = sbr.rel (%p137) target = $region16
      $region15: #{_lambda_.3} parent=11 // pred_region
        %s140 = smul.u32 6, %s19
        %p141 = scmp.lt.s32.totalorder %s140, 5
        %s142 = scalar_select %p141, %s140, 5
        %s143 = smul.addr %s142, 4
        %s144 = scalar_lea.vmem %s1, %s143
        %s145 = smul.u32 6, %s19
      $region16: #{_lambda_.3} parent=11 // pred_fallthru
        _
      // Predicated region
      $region17: #{_lambda_.3} parent=11 // pred_check
        %p146 = pneg %p96
      $region18: #{_lambda_.3} parent=11 // pred_check_branch
        %148 = sbr.rel (%p146) target = $region20
      $region19: #{_lambda_.3} parent=11 // pred_region
        _
      $region20: #{_lambda_.3} parent=11 // pred_fallthru
        _
    $region12: #{_lambda_.3} parent=5 // pred_fallthru
      _
    %p149 = scmp.lt.s32.totalorder %s9, 3
    // Predicated region
    $region21: #{_lambda_.3} parent=5 // pred_check
      %p150 = pneg %p149
    $region22: #{_lambda_.3} parent=5 // pred_check_branch
      %152 = sbr.rel (%p150) target = $region24
    $region23: #{_lambda_.3} parent=5 // pred_region
      // Predicated region
      $region25: #{_lambda_.3} parent=23 // pred_check
        %p153 = pneg %p43
      $region26: #{_lambda_.3} parent=23 // pred_check_branch
        %155 = sbr.rel (%p153) target = $region28
      $region27: #{_lambda_.3} parent=23 // pred_region
        %s156 = smul.u32 2, %s16
        %p157 = scmp.lt.s32.totalorder %s156, 5
        %s158 = scalar_select %p157, %s156, 5
        %p159 = scmp.lt.s32.totalorder %s17, 0
        %s160 = scalar_select %p159, %s17, 0
        %s161 = sadd.s32 %s160, %s158
        %s162 = smul.addr %s161, 4
        %s163 = scalar_lea.vmem %s0, %s162
        %s164 = smul.u32 2, %s16
      $region28: #{_lambda_.3} parent=23 // pred_fallthru
        _
    $region24: #{_lambda_.3} parent=5 // pred_fallthru
      _
    %p165 = scmp.le.s32.totalorder 1, %s9
    %p166 = scmp.lt.s32.totalorder %s9, 4
    %p167 = pnand %p165, %p166
    %p168 = pneg %p167
    // Predicated region
    $region29: #{_lambda_.3} parent=5 // pred_check
      _
    $region30: #{_lambda_.3} parent=5 // pred_check_branch
      %170 = sbr.rel (%p167) target = $region32
    $region31: #{_lambda_.3} parent=5 // pred_region
      %s171 = ssub.s32 %s9, 1
      %s172 = smul.u32 2, %s18
      %p173 = scmp.lt.s32.totalorder %s172, 5
      %s174 = scalar_select %p173, %s172, 5
      %p175 = scmp.lt.s32.totalorder %s19, 0
      %s176 = scalar_select %p175, %s19, 0
      %s177 = sadd.s32 %s176, %s174
      %s178 = smul.addr %s177, 4
      %s179 = scalar_lea.vmem %s0, %s178
      %p180 = pneg %p49
      %p181 = pneg %p46
      %s182 = smul.u32 6, %s19
      %p183 = scmp.lt.s32.totalorder %s182, 5
      %s184 = scalar_select %p183, %s182, 5
      %s185 = smul.addr %s184, 4
      %s186 = scalar_lea.vmem %s1, %s185
      %p187 = pneg %p75
      %p188 = pneg %p72
      %p189 = pneg %p96
      %p190 = pneg %p93
      %p191 = pneg %p122
      %p192 = pneg %p119
      %s193 = smul.u32 2, %s18
      %p194 = scmp.lt.s32.totalorder %s193, 5
      %s195 = scalar_select %p194, %s193, 5
      %s196 = smul.addr %s195, 4
      %s197 = scalar_lea.vmem %s3, %s196
      %s198 = smul.u32 2, %s18
      %p199 = scmp.lt.s32.totalorder %s198, 5
      %s200 = scalar_select %p199, %s198, 5
      %p201 = scmp.lt.s32.totalorder %s19, 0
      %s202 = scalar_select %p201, %s19, 0
      %s203 = sadd.s32 %s202, %s200
      %s204 = smul.addr %s203, 4
      %s205 = scalar_lea.vmem %s0, %s204
      %s206 = smul.u32 2, %s18
      %s207 = smul.u32 6, %s19
      %p208 = scmp.lt.s32.totalorder %s207, 5
      %s209 = scalar_select %p208, %s207, 5
      %s210 = smul.addr %s209, 4
      %s211 = scalar_lea.vmem %s1, %s210
      %s212 = smul.u32 6, %s19
      %s213 = smul.u32 2, %s18
      %p214 = scmp.lt.s32.totalorder %s213, 5
      %s215 = scalar_select %p214, %s213, 5
      %s216 = smul.addr %s215, 4
      %s217 = scalar_lea.vmem %s3, %s216
      %s218 = smul.u32 2, %s18
      %p220 = scmp.eq.s32.totalorder %s19, 0
      // Predicated region
      $region33: #{_lambda_.3} parent=31 // pred_check
        %p221 = pneg %p220
      $region34: #{_lambda_.3} parent=31 // pred_check_branch
        %223 = sbr.rel (%p221) target = $region36
      $region35: #{_lambda_.3} parent=31 // pred_region
        %vm224 = vcmask 130048
        %225 = vst.msk [vmem:[#allocation2] sm:$0xff] %vm224, 0.0
        %226 = vst.msk [vmem:[#allocation2 + $0x8] sm:$0xff] %vm224, 0.0
      $region36: #{_lambda_.3} parent=31 // pred_fallthru
        _
      %v227 = vld [vmem:[#allocation2] sm:$0xff]
      %v228 = vld [vmem:[#allocation2 + $0x8] sm:$0xff]
      %v229 = vld [vmem:[%s205] sm:$0xf]
      %v230 = vld [vmem:[%s205 + $0x4] sm:$0xf]
      %v231 = vld [vmem:[%s211] sm:$0xf]
      %v232 = vld [vmem:[%s211 + $0x4] sm:$0xf]
      %v233 = vld [vmem:[%s211 + $0x8] sm:$0xf]
      %v234 = vld [vmem:[%s211 + $0xc] sm:$0xf]
      %v235 = vld [vmem:[%s211 + $0x10] sm:$0xf]
      %v236 = vld [vmem:[%s211 + $0x14] sm:$0xf]
      %v239 = vunpack.c.l.b16 %v229
      %v240 = vunpack.c.l.b16 %v230
      %v241 = vpack.c.b16 %v240, %v239
      %v248 = vunpack.c.l.b16 %v231
      %v249 = vunpack.c.l.b16 %v232
      %v250 = vunpack.c.l.b16 %v233
      %v251 = vunpack.c.l.b16 %v234
      %v252 = vunpack.c.l.b16 %v235
      %v253 = vunpack.c.l.b16 %v236
      %v254 = vpack.c.b16 %v249, %v248
      %v255 = vpack.c.b16 %v251, %v250
      %v256 = vpack.c.b16 %v253, %v252
      %vm260 = vcmask 392192
      %v262 = vsel %vm260, %v241, 0
      %264 = vmatpush.bf16.msra.mxu0 0
      %265 = vmatpush.bf16.msra.mxu0 0
      %266 = vmatpush.bf16.msra.mxu0 0
      %267 = vmatpush.bf16.msra.mxu0 0
      %268 = vmatpush.bf16.msra.mxu0 0
      %269 = vmatpush.bf16.msra.mxu0 %v256
      %270 = vmatpush.bf16.msra.mxu0 %v255
      %271 = vmatpush.bf16.msra.mxu0 %v254
      %272 = vmatmul.bf16.gmra.mxu0 %v262
      %v273 = vpop.f32.mrf.mxu0
      %v274 = vadd.f32 0.0, %v273
      %v275 = vpop.f32.mrf.mxu0
      %v276 = vadd.f32 0.0, %v275
      %277 = vdwg.mxu0
      %v278 = vadd.f32 %v227, %v274
      %v279 = vadd.f32 %v228, %v276
      %vm280 = vcmask 130048
      %281 = vst.msk [vmem:[#allocation2] sm:$0xff] %vm280, %v278
      %282 = vst.msk [vmem:[#allocation2 + $0x8] sm:$0xff] %vm280, %v279
      // Predicated region
      $region37: #{_lambda_.3} parent=31 // pred_check
        %p283 = pneg %p220
      $region38: #{_lambda_.3} parent=31 // pred_check_branch
        %285 = sbr.rel (%p283) target = $region40
      $region39: #{_lambda_.3} parent=31 // pred_region
        %v286 = vld [vmem:[#allocation2] sm:$0xff]
        %v287 = vld [vmem:[#allocation2 + $0x8] sm:$0xff]
        %v288 = vld [vmem:[%s2] sm:$0x1]
        %v290 = vperm.slane %v288, 0
        %v292 = vadd.f32 %v286, %v290
        %v293 = vadd.f32 %v287, %v290
        %v294 = vmax.f32 %v292, 0.0
        %v295 = vmax.f32 %v293, 0.0
        %v296 = vpack.c.bf16 %v294, %v294
        %v297 = vpack.c.bf16 %v295, %v295
        %vm298 = vcmask 125952
        %299 = vst.msk [vmem:[%s217] sm:$0xf] %vm298, %v296
        %300 = vst.msk [vmem:[%s217 + $0x4] sm:$0xf] %vm298, %v297
      $region40: #{_lambda_.3} parent=31 // pred_fallthru
        _
      %s301 = smul.u32 2, %s18
      %p302 = scmp.lt.s32.totalorder %s301, 5
      %s303 = scalar_select %p302, %s301, 5
      %s304 = smul.addr %s303, 4
      %s305 = scalar_lea.vmem %s3, %s304
      // Predicated region
      $region41: #{_lambda_.3} parent=31 // pred_check
        %p306 = pneg %p119
      $region42: #{_lambda_.3} parent=31 // pred_check_branch
        %308 = sbr.rel (%p306) target = $region44
      $region43: #{_lambda_.3} parent=31 // pred_region
        %s309 = smul.u32 2, %s18
      $region44: #{_lambda_.3} parent=31 // pred_fallthru
        _
    $region32: #{_lambda_.3} parent=5 // pred_fallthru
      _
    %p310 = scmp.le.s32.totalorder 2, %s9
    // Predicated region
    $region45: #{_lambda_.3} parent=5 // pred_check
      %p311 = pneg %p310
    $region46: #{_lambda_.3} parent=5 // pred_check_branch
      %313 = sbr.rel (%p311) target = $region48
    $region47: #{_lambda_.3} parent=5 // pred_region
      %s314 = ssub.s32 %s9, 2
      // Predicated region
      $region49: #{_lambda_.3} parent=47 // pred_check
        %p315 = pneg %p125
      $region50: #{_lambda_.3} parent=47 // pred_check_branch
        %317 = sbr.rel (%p315) target = $region52
      $region51: #{_lambda_.3} parent=47 // pred_region
        %s318 = smul.u32 2, %s20
        %p319 = scmp.lt.s32.totalorder %s318, 5
        %s320 = scalar_select %p319, %s318, 5
        %s321 = smul.addr %s320, 4
        %s322 = scalar_lea.vmem %s3, %s321
      $region52: #{_lambda_.3} parent=47 // pred_fallthru
        _
    $region48: #{_lambda_.3} parent=5 // pred_fallthru
      _
  $region6: #{_lambda_.3} parent=0 // loop_footer
    %s13 = sadd.s32 1, %s9
  $region7: #{_lambda_.3} parent=0 // loop_footer_branch
    %8 = sbr.rel target = $region3
  $region8: #{_lambda_.3} parent=0 // loop_exit
    _

// kernel: _lambda_.5
$region0: #{_lambda_.5}
  #allocation0 [shape = 'u32[]', space=smem, size = 0x4, offset = 0x4, fixed_abs, tag = 'smem constant byte address 0x4 - core index']
  #allocation1 [shape = 'u32[72,128]{1,0:T(1,128)}', space=vmem, size = 0x9000, scoped, tag = 'internal scratch']
  #allocation2 [shape = 'f32[16,16]{1,0:T(8,128)}', space=vmem, size = 0x2000, scoped, tag = 'scratch operand']
  %s0 = inlined_call_operand.vmem [shape: bf16[48,48], index: 0, kind: input, shape index: {}]
  %s1 = inlined_call_operand.vmem [shape: bf16[48,16], index: 1, kind: input, shape index: {}]
  %s2 = inlined_call_operand.vmem [shape: f32[16,64], index: 2, kind: input, shape index: {}]
  %s3 = inlined_call_operand.vmem [shape: f32[1,64], index: 3, kind: input, shape index: {}]
  %s4 = inlined_call_operand.vmem [shape: f32[64,16], index: 4, kind: input, shape index: {}]
  %s5 = inlined_call_operand.vmem [shape: f32[1,16], index: 5, kind: input, shape index: {}]
  %s6 = inlined_call_operand.vmem [shape: f32[16,3], index: 6, kind: input, shape index: {}]
  %s7 = inlined_call_operand.vmem [shape: f32[1,3], index: 7, kind: input, shape index: {}]
  %s8 = inlined_call_operand.vmem [shape: f32[48,3], index: 8, kind: output, shape index: {}]
  %s9 = sld [smem:[#allocation0]]
  $region73: #{_lambda_.5} parent=0
    _
  %s11 = ssub.s32 1, %s9
  %s12 = scalar_select 0, %s11, %s9
  loop: start=0, step=1, limit=5
  $region2: #{_lambda_.5} parent=0 // loop_pre_header
    _
  $region3: #{_lambda_.5} parent=0 // loop_header
    %s14 = sphi 0, %s18
    %p15 = scmp.ge.s32.totalorder %s14, 5
    %s21 = sphi 0, %s33
    %s22 = sphi 0, %s29
    %s23 = sphi 0, %s21
    %s24 = sphi 0, %s22
    %s25 = sphi 0, %s23
    %s26 = sphi 0, %s24
    %s38 = sphi 0, %s40
    %s41 = sphi 0, %s38
    %s42 = sphi 0, %s41
    %s58 = sphi 0, %s42
    %s64 = sphi 0, %s66
    %s67 = sphi 0, %s64
    %s68 = sphi 0, %s67
    %s84 = sphi 0, %s68
    %s88 = sphi 0, %s88
    %s90 = sphi 0, %s88
    %s91 = sphi 0, %s90
    %s105 = sphi 0, %s91
    %s109 = sphi 0, %s109
    %s111 = sphi 0, %s109
    %s112 = sphi 0, %s111
    %s126 = sphi 0, %s112
    %s130 = sphi 0, %s130
    %s132 = sphi 0, %s130
    %s133 = sphi 0, %s132
    %s147 = sphi 0, %s133
    %s151 = sphi 0, %s151
    %s153 = sphi 0, %s151
    %s154 = sphi 0, %s153
    %s168 = sphi 0, %s154
    %s172 = sphi 0, %s172
    %s174 = sphi 0, %s172
    %s175 = sphi 0, %s174
    %s189 = sphi 0, %s175
    %s193 = sphi 0, %s193
    %s195 = sphi 0, %s193
    %s196 = sphi 0, %s195
    %s210 = sphi 0, %s196
    %s216 = sphi 0, %s218
    %s219 = sphi 0, %s216
    %s220 = sphi 0, %s219
    %s236 = sphi 0, %s220
  $region4: #{_lambda_.5} parent=0 // loop_header_branch
    %17 = sbr.rel (%p15) target = $region8
  $region5: #{_lambda_.5} parent=0 // loop_body
    %s19 = ssub.s32 %s14, 1
    %s20 = ssub.s32 %s14, 2
    %s27 = sadd.s32 1, %s22
    %p28 = scmp.ge.s32.totalorder %s27, 1
    %s29 = scalar_select %p28, 0, %s27
    %s30 = sadd.s32 1, %s21
    %s31 = scalar_select %p28, %s30, %s21
    %p32 = scmp.ge.s32.totalorder %s31, 3
    %s33 = scalar_select %p32, 0, %s31
    %s34 = ssub.s32 %s21, %s33
    %s35 = ssub.s32 %s22, %s29
    %s36 = sor.u32 %s34, %s35
    %p37 = scmp.eq.s32.totalorder %s36, 0
    %s39 = sadd.s32 %s38, 1
    %s40 = scalar_select %p37, %s38, %s39
    %p43 = pneg %p37
    %p44 = scmp.eq.s32.totalorder %s14, 2
    %p45 = por %p43, %p44
    %p46 = scmp.ne.s32.totalorder %s38, %s41
    %p47 = scmp.eq.s32.totalorder %s14, 0
    %p48 = por %p46, %p47
    %p49 = scmp.ne.s32.totalorder %s38, %s41
    %p50 = scmp.eq.s32.totalorder %s19, 2
    %p51 = por %p49, %p50
    %p52 = scmp.ne.s32.totalorder %s41, %s42
    %p53 = scmp.eq.s32.totalorder %s19, 0
    %p54 = por %p52, %p53
    %p55 = scmp.ne.s32.totalorder %s41, %s42
    %p56 = scmp.eq.s32.totalorder %s20, 2
    %p57 = por %p55, %p56
    %p59 = scmp.ne.s32.totalorder %s42, %s58
    %p60 = scmp.eq.s32.totalorder %s20, 0
    %p61 = por %p59, %p60
    %s62 = ssub.s32 %s22, %s29
    %p63 = scmp.eq.s32.totalorder %s62, 0
    %s65 = sadd.s32 %s64, 1
    %s66 = scalar_select %p63, %s64, %s65
    %p69 = pneg %p63
    %p70 = scmp.eq.s32.totalorder %s14, 2
    %p71 = por %p69, %p70
    %p72 = scmp.ne.s32.totalorder %s64, %s67
    %p73 = scmp.eq.s32.totalorder %s14, 0
    %p74 = por %p72, %p73
    %p75 = scmp.ne.s32.totalorder %s64, %s67
    %p76 = scmp.eq.s32.totalorder %s19, 2
    %p77 = por %p75, %p76
    %p78 = scmp.ne.s32.totalorder %s67, %s68
    %p79 = scmp.eq.s32.totalorder %s19, 0
    %p80 = por %p78, %p79
    %p81 = scmp.ne.s32.totalorder %s67, %s68
    %p82 = scmp.eq.s32.totalorder %s20, 2
    %p83 = por %p81, %p82
    %p85 = scmp.ne.s32.totalorder %s68, %s84
    %p86 = scmp.eq.s32.totalorder %s20, 0
    %p87 = por %p85, %p86
    %s89 = sadd.s32 %s88, 1
    %p92 = scmp.eq.s32.totalorder %s14, 2
    %p93 = scmp.ne.s32.totalorder %s88, %s90
    %p94 = scmp.eq.s32.totalorder %s14, 0
    %p95 = por %p93, %p94
    %p96 = scmp.ne.s32.totalorder %s88, %s90
    %p97 = scmp.eq.s32.totalorder %s19, 2
    %p98 = por %p96, %p97
    %p99 = scmp.ne.s32.totalorder %s90, %s91
    %p100 = scmp.eq.s32.totalorder %s19, 0
    %p101 = por %p99, %p100
    %p102 = scmp.ne.s32.totalorder %s90, %s91
    %p103 = scmp.eq.s32.totalorder %s20, 2
    %p104 = por %p102, %p103
    %p106 = scmp.ne.s32.totalorder %s91, %s105
    %p107 = scmp.eq.s32.totalorder %s20, 0
    %p108 = por %p106, %p107
    %s110 = sadd.s32 %s109, 1
    %p113 = scmp.eq.s32.totalorder %s14, 2
    %p114 = scmp.ne.s32.totalorder %s109, %s111
    %p115 = scmp.eq.s32.totalorder %s14, 0
    %p116 = por %p114, %p115
    %p117 = scmp.ne.s32.totalorder %s109, %s111
    %p118 = scmp.eq.s32.totalorder %s19, 2
    %p119 = por %p117, %p118
    %p120 = scmp.ne.s32.totalorder %s111, %s112
    %p121 = scmp.eq.s32.totalorder %s19, 0
    %p122 = por %p120, %p121
    %p123 = scmp.ne.s32.totalorder %s111, %s112
    %p124 = scmp.eq.s32.totalorder %s20, 2
    %p125 = por %p123, %p124
    %p127 = scmp.ne.s32.totalorder %s112, %s126
    %p128 = scmp.eq.s32.totalorder %s20, 0
    %p129 = por %p127, %p128
    %s131 = sadd.s32 %s130, 1
    %p134 = scmp.eq.s32.totalorder %s14, 2
    %p135 = scmp.ne.s32.totalorder %s130, %s132
    %p136 = scmp.eq.s32.totalorder %s14, 0
    %p137 = por %p135, %p136
    %p138 = scmp.ne.s32.totalorder %s130, %s132
    %p139 = scmp.eq.s32.totalorder %s19, 2
    %p140 = por %p138, %p139
    %p141 = scmp.ne.s32.totalorder %s132, %s133
    %p142 = scmp.eq.s32.totalorder %s19, 0
    %p143 = por %p141, %p142
    %p144 = scmp.ne.s32.totalorder %s132, %s133
    %p145 = scmp.eq.s32.totalorder %s20, 2
    %p146 = por %p144, %p145
    %p148 = scmp.ne.s32.totalorder %s133, %s147
    %p149 = scmp.eq.s32.totalorder %s20, 0
    %p150 = por %p148, %p149
    %s152 = sadd.s32 %s151, 1
    %p155 = scmp.eq.s32.totalorder %s14, 2
    %p156 = scmp.ne.s32.totalorder %s151, %s153
    %p157 = scmp.eq.s32.totalorder %s14, 0
    %p158 = por %p156, %p157
    %p159 = scmp.ne.s32.totalorder %s151, %s153
    %p160 = scmp.eq.s32.totalorder %s19, 2
    %p161 = por %p159, %p160
    %p162 = scmp.ne.s32.totalorder %s153, %s154
    %p163 = scmp.eq.s32.totalorder %s19, 0
    %p164 = por %p162, %p163
    %p165 = scmp.ne.s32.totalorder %s153, %s154
    %p166 = scmp.eq.s32.totalorder %s20, 2
    %p167 = por %p165, %p166
    %p169 = scmp.ne.s32.totalorder %s154, %s168
    %p170 = scmp.eq.s32.totalorder %s20, 0
    %p171 = por %p169, %p170
    %s173 = sadd.s32 %s172, 1
    %p176 = scmp.eq.s32.totalorder %s14, 2
    %p177 = scmp.ne.s32.totalorder %s172, %s174
    %p178 = scmp.eq.s32.totalorder %s14, 0
    %p179 = por %p177, %p178
    %p180 = scmp.ne.s32.totalorder %s172, %s174
    %p181 = scmp.eq.s32.totalorder %s19, 2
    %p182 = por %p180, %p181
    %p183 = scmp.ne.s32.totalorder %s174, %s175
    %p184 = scmp.eq.s32.totalorder %s19, 0
    %p185 = por %p183, %p184
    %p186 = scmp.ne.s32.totalorder %s174, %s175
    %p187 = scmp.eq.s32.totalorder %s20, 2
    %p188 = por %p186, %p187
    %p190 = scmp.ne.s32.totalorder %s175, %s189
    %p191 = scmp.eq.s32.totalorder %s20, 0
    %p192 = por %p190, %p191
    %s194 = sadd.s32 %s193, 1
    %p197 = scmp.eq.s32.totalorder %s14, 2
    %p198 = scmp.ne.s32.totalorder %s193, %s195
    %p199 = scmp.eq.s32.totalorder %s14, 0
    %p200 = por %p198, %p199
    %p201 = scmp.ne.s32.totalorder %s193, %s195
    %p202 = scmp.eq.s32.totalorder %s19, 2
    %p203 = por %p201, %p202
    %p204 = scmp.ne.s32.totalorder %s195, %s196
    %p205 = scmp.eq.s32.totalorder %s19, 0
    %p206 = por %p204, %p205
    %p207 = scmp.ne.s32.totalorder %s195, %s196
    %p208 = scmp.eq.s32.totalorder %s20, 2
    %p209 = por %p207, %p208
    %p211 = scmp.ne.s32.totalorder %s196, %s210
    %p212 = scmp.eq.s32.totalorder %s20, 0
    %p213 = por %p211, %p212
    %s214 = ssub.s32 %s21, %s33
    %p215 = scmp.eq.s32.totalorder %s214, 0
    %s217 = sadd.s32 %s216, 1
    %s218 = scalar_select %p215, %s216, %s217
    %p221 = pneg %p215
    %p222 = scmp.eq.s32.totalorder %s14, 2
    %p223 = por %p221, %p222
    %p224 = scmp.ne.s32.totalorder %s216, %s219
    %p225 = scmp.eq.s32.totalorder %s14, 0
    %p226 = por %p224, %p225
    %p227 = scmp.ne.s32.totalorder %s216, %s219
    %p228 = scmp.eq.s32.totalorder %s19, 2
    %p229 = por %p227, %p228
    %p230 = scmp.ne.s32.totalorder %s219, %s220
    %p231 = scmp.eq.s32.totalorder %s19, 0
    %p232 = por %p230, %p231
    %p233 = scmp.ne.s32.totalorder %s219, %s220
    %p234 = scmp.eq.s32.totalorder %s20, 2
    %p235 = por %p233, %p234
    %p237 = scmp.ne.s32.totalorder %s220, %s236
    %p238 = scmp.eq.s32.totalorder %s20, 0
    %p239 = por %p237, %p238
    %p240 = scmp.le.s32.totalorder 1, %s14
    %p241 = scmp.lt.s32.totalorder %s14, 4
    %p242 = pnand %p240, %p241
    %p243 = pneg %p242
    // Predicated region
    $region9: #{_lambda_.5} parent=5 // pred_check
      _
    $region10: #{_lambda_.5} parent=5 // pred_check_branch
      %245 = sbr.rel (%p242) target = $region12
    $region11: #{_lambda_.5} parent=5 // pred_region
      %s246 = ssub.s32 %s14, 1
      // Predicated region
      $region13: #{_lambda_.5} parent=11 // pred_check
        %p247 = pneg %p80
      $region14: #{_lambda_.5} parent=11 // pred_check_branch
        %249 = sbr.rel (%p247) target = $region16
      $region15: #{_lambda_.5} parent=11 // pred_region
        %s250 = smul.u32 6, %s24
        %p251 = scmp.lt.s32.totalorder %s250, 5
        %s252 = scalar_select %p251, %s250, 5
        %s253 = smul.addr %s252, 4
        %s254 = scalar_lea.vmem %s1, %s253
        %s255 = smul.u32 6, %s24
      $region16: #{_lambda_.5} parent=11 // pred_fallthru
        _
      // Predicated region
      $region17: #{_lambda_.5} parent=11 // pred_check
        %p256 = pneg %p101
      $region18: #{_lambda_.5} parent=11 // pred_check_branch
        %258 = sbr.rel (%p256) target = $region20
      $region19: #{_lambda_.5} parent=11 // pred_region
        _
      $region20: #{_lambda_.5} parent=11 // pred_fallthru
        _
      // Predicated region
      $region21: #{_lambda_.5} parent=11 // pred_check
        %p259 = pneg %p122
      $region22: #{_lambda_.5} parent=11 // pred_check_branch
        %261 = sbr.rel (%p259) target = $region24
      $region23: #{_lambda_.5} parent=11 // pred_region
        _
      $region24: #{_lambda_.5} parent=11 // pred_fallthru
        _
      // Predicated region
      $region25: #{_lambda_.5} parent=11 // pred_check
        %p262 = pneg %p143
      $region26: #{_lambda_.5} parent=11 // pred_check_branch
        %264 = sbr.rel (%p262) target = $region28
      $region27: #{_lambda_.5} parent=11 // pred_region
        _
      $region28: #{_lambda_.5} parent=11 // pred_fallthru
        _
      // Predicated region
      $region29: #{_lambda_.5} parent=11 // pred_check
        %p265 = pneg %p164
      $region30: #{_lambda_.5} parent=11 // pred_check_branch
        %267 = sbr.rel (%p265) target = $region32
      $region31: #{_lambda_.5} parent=11 // pred_region
        _
      $region32: #{_lambda_.5} parent=11 // pred_fallthru
        _
      // Predicated region
      $region33: #{_lambda_.5} parent=11 // pred_check
        %p268 = pneg %p185
      $region34: #{_lambda_.5} parent=11 // pred_check_branch
        %270 = sbr.rel (%p268) target = $region36
      $region35: #{_lambda_.5} parent=11 // pred_region
        _
      $region36: #{_lambda_.5} parent=11 // pred_fallthru
        _
      // Predicated region
      $region37: #{_lambda_.5} parent=11 // pred_check
        %p271 = pneg %p206
      $region38: #{_lambda_.5} parent=11 // pred_check_branch
        %273 = sbr.rel (%p271) target = $region40
      $region39: #{_lambda_.5} parent=11 // pred_region
        _
      $region40: #{_lambda_.5} parent=11 // pred_fallthru
        _
    $region12: #{_lambda_.5} parent=5 // pred_fallthru
      _
    %p274 = scmp.lt.s32.totalorder %s14, 3
    // Predicated region
    $region41: #{_lambda_.5} parent=5 // pred_check
      %p275 = pneg %p274
    $region42: #{_lambda_.5} parent=5 // pred_check_branch
      %277 = sbr.rel (%p275) target = $region44
    $region43: #{_lambda_.5} parent=5 // pred_region
      // Predicated region
      $region45: #{_lambda_.5} parent=43 // pred_check
        %p278 = pneg %p48
      $region46: #{_lambda_.5} parent=43 // pred_check_branch
        %280 = sbr.rel (%p278) target = $region48
      $region47: #{_lambda_.5} parent=43 // pred_region
        %s281 = smul.u32 2, %s21
        %p282 = scmp.lt.s32.totalorder %s281, 5
        %s283 = scalar_select %p282, %s281, 5
        %p284 = scmp.lt.s32.totalorder %s22, 0
        %s285 = scalar_select %p284, %s22, 0
        %s286 = sadd.s32 %s285, %s283
        %s287 = smul.addr %s286, 4
        %s288 = scalar_lea.vmem %s0, %s287
        %s289 = smul.u32 2, %s21
      $region48: #{_lambda_.5} parent=43 // pred_fallthru
        _
    $region44: #{_lambda_.5} parent=5 // pred_fallthru
      _
    %p290 = scmp.le.s32.totalorder 1, %s14
    %p291 = scmp.lt.s32.totalorder %s14, 4
    %p292 = pnand %p290, %p291
    %p293 = pneg %p292
    // Predicated region
    $region49: #{_lambda_.5} parent=5 // pred_check
      _
    $region50: #{_lambda_.5} parent=5 // pred_check_branch
      %295 = sbr.rel (%p292) target = $region52
    $region51: #{_lambda_.5} parent=5 // pred_region
      %s296 = ssub.s32 %s14, 1
      %s297 = smul.u32 2, %s23
      %p298 = scmp.lt.s32.totalorder %s297, 5
      %s299 = scalar_select %p298, %s297, 5
      %p300 = scmp.lt.s32.totalorder %s24, 0
      %s301 = scalar_select %p300, %s24, 0
      %s302 = sadd.s32 %s301, %s299
      %s303 = smul.addr %s302, 4
      %s304 = scalar_lea.vmem %s0, %s303
      %p305 = pneg %p54
      %p306 = pneg %p51
      %s307 = smul.u32 6, %s24
      %p308 = scmp.lt.s32.totalorder %s307, 5
      %s309 = scalar_select %p308, %s307, 5
      %s310 = smul.addr %s309, 4
      %s311 = scalar_lea.vmem %s1, %s310
      %p312 = pneg %p80
      %p313 = pneg %p77
      %p314 = pneg %p101
      %p315 = pneg %p98
      %p316 = pneg %p122
      %p317 = pneg %p119
      %p318 = pneg %p143
      %p319 = pneg %p140
      %p320 = pneg %p164
      %p321 = pneg %p161
      %p322 = pneg %p185
      %p323 = pneg %p182
      %p324 = pneg %p206
      %p325 = pneg %p203
      %p326 = pneg %p232
      %p327 = pneg %p229
      %s328 = smul.u32 2, %s23
      %p329 = scmp.lt.s32.totalorder %s328, 5
      %s330 = scalar_select %p329, %s328, 5
      %s331 = smul.addr %s330, 8
      %s332 = scalar_lea.vmem %s8, %s331
      %s333 = smul.u32 2, %s23
      %p334 = scmp.lt.s32.totalorder %s333, 5
      %s335 = scalar_select %p334, %s333, 5
      %p336 = scmp.lt.s32.totalorder %s24, 0
      %s337 = scalar_select %p336, %s24, 0
      %s338 = sadd.s32 %s337, %s335
      %s339 = smul.addr %s338, 4
      %s340 = scalar_lea.vmem %s0, %s339
      %s341 = smul.u32 2, %s23
      %s342 = smul.u32 6, %s24
      %p343 = scmp.lt.s32.totalorder %s342, 5
      %s344 = scalar_select %p343, %s342, 5
      %s345 = smul.addr %s344, 4
      %s346 = scalar_lea.vmem %s1, %s345
      %s347 = smul.u32 6, %s24
      %s348 = smul.u32 2, %s23
      %p349 = scmp.lt.s32.totalorder %s348, 5
      %s350 = scalar_select %p349, %s348, 5
      %s351 = smul.addr %s350, 8
      %s352 = scalar_lea.vmem %s8, %s351
      %s353 = smul.u32 2, %s23
      %p355 = scmp.eq.s32.totalorder %s24, 0
      // Predicated region
      $region53: #{_lambda_.5} parent=51 // pred_check
        %p356 = pneg %p355
      $region54: #{_lambda_.5} parent=51 // pred_check_branch
        %358 = sbr.rel (%p356) target = $region56
      $region55: #{_lambda_.5} parent=51 // pred_region
        %vm359 = vcmask 130048
        %360 = vst.msk [vmem:[#allocation2] sm:$0xff] %vm359, 0.0
        %361 = vst.msk [vmem:[#allocation2 + $0x8] sm:$0xff] %vm359, 0.0
      $region56: #{_lambda_.5} parent=51 // pred_fallthru
        _
      %v362 = vld [vmem:[#allocation2] sm:$0xff]
      %v363 = vld [vmem:[#allocation2 + $0x8] sm:$0xff]
      %v364 = vld [vmem:[%s340] sm:$0xf]
      %v365 = vld [vmem:[%s340 + $0x4] sm:$0xf]
      %v366 = vld [vmem:[%s346] sm:$0xf]
      %v367 = vld [vmem:[%s346 + $0x4] sm:$0xf]
      %v368 = vld [vmem:[%s346 + $0x8] sm:$0xf]
      %v369 = vld [vmem:[%s346 + $0xc] sm:$0xf]
      %v370 = vld [vmem:[%s346 + $0x10] sm:$0xf]
      %v371 = vld [vmem:[%s346 + $0x14] sm:$0xf]
      %v374 = vunpack.c.l.b16 %v364
      %v375 = vunpack.c.l.b16 %v365
      %v376 = vpack.c.b16 %v375, %v374
      %v383 = vunpack.c.l.b16 %v366
      %v384 = vunpack.c.l.b16 %v367
      %v385 = vunpack.c.l.b16 %v368
      %v386 = vunpack.c.l.b16 %v369
      %v387 = vunpack.c.l.b16 %v370
      %v388 = vunpack.c.l.b16 %v371
      %v389 = vpack.c.b16 %v384, %v383
      %v390 = vpack.c.b16 %v386, %v385
      %v391 = vpack.c.b16 %v388, %v387
      %vm395 = vcmask 392192
      %v397 = vsel %vm395, %v376, 0
      %399 = vmatpush.bf16.msra.mxu0 0
      %400 = vmatpush.bf16.msra.mxu0 0
      %401 = vmatpush.bf16.msra.mxu0 0
      %402 = vmatpush.bf16.msra.mxu0 0
      %403 = vmatpush.bf16.msra.mxu0 0
      %404 = vmatpush.bf16.msra.mxu0 %v391
      %405 = vmatpush.bf16.msra.mxu0 %v390
      %406 = vmatpush.bf16.msra.mxu0 %v389
      %407 = vmatmul.bf16.gmra.mxu0 %v397
      %v408 = vpop.f32.mrf.mxu0
      %v409 = vadd.f32 0.0, %v408
      %v410 = vpop.f32.mrf.mxu0
      %v411 = vadd.f32 0.0, %v410
      %412 = vdwg.mxu0
      %v413 = vadd.f32 %v362, %v409
      %v414 = vadd.f32 %v363, %v411
      %vm415 = vcmask 130048
      %416 = vst.msk [vmem:[#allocation2] sm:$0xff] %vm415, %v413
      %417 = vst.msk [vmem:[#allocation2 + $0x8] sm:$0xff] %vm415, %v414
      // Predicated region
      $region57: #{_lambda_.5} parent=51 // pred_check
        %p418 = pneg %p355
      $region58: #{_lambda_.5} parent=51 // pred_check_branch
        %420 = sbr.rel (%p418) target = $region60
      $region59: #{_lambda_.5} parent=51 // pred_region
        %v421 = vld [vmem:[#allocation2] sm:$0xff]
        %v422 = vld [vmem:[#allocation2 + $0x8] sm:$0xff]
        %v423 = vld [vmem:[%s2] sm:$0xff]
        %v424 = vld [vmem:[%s2 + $0x8] sm:$0xff]
        %v425 = vld [vmem:[%s3] sm:$0x1]
        %v427 = vperm.slane %v425, 0
        %v430 = vsel %vm415, %v421, 0
        %v433 = vsel %vm415, %v422, 0
        %435 = vmatpush.msra.mxu0 0.0
        %436 = vmatpush.msra.mxu0 0.0
        %437 = vmatpush.msra.mxu0 0.0
        %438 = vmatpush.msra.mxu0 0.0
        %439 = vmatpush.msra.mxu0 0.0
        %440 = vmatpush.msra.mxu0 0.0
        %441 = vmatpush.msra.mxu0 0.0
        %442 = vmatpush.msra.mxu0 0.0
        %443 = vmatpush.msra.mxu0 0.0
        %444 = vmatpush.msra.mxu0 0.0
        %445 = vmatpush.msra.mxu0 0.0
        %446 = vmatpush.msra.mxu0 0.0
        %447 = vmatpush.msra.mxu0 0.0
        %448 = vmatpush.msra.mxu0 0.0
        %449 = vmatpush.msra.mxu0 %v424
        %450 = vmatpush.msra.mxu0 %v423
        %451 = vmatmul.f32.gmra.mxu0 %v430
        %v452 = vpop.f32.mrf.mxu0
        %v453 = vadd.f32 %v427, %v452
        %454 = vmatmul.f32.gmra.mxu0 %v433
        %v455 = vpop.f32.mrf.mxu0
        %v456 = vadd.f32 %v427, %v455
        %457 = vdwg.mxu0
        %vm458 = vcmp.gt.f32.partialorder %v453, 0.0
        %vm459 = vcmp.gt.f32.partialorder %v456, 0.0
        %v460 = vmul.f32 %v453, 0.02
        %v461 = vmul.f32 %v456, 0.02
        %v462 = vsel %vm458, %v453, %v460
        %v463 = vsel %vm459, %v456, %v461
        %v464 = vld [vmem:[%s4] sm:$0xff]
        %v465 = vld [vmem:[%s4 + $0x8] sm:$0xff]
        %v466 = vld [vmem:[%s4 + $0x10] sm:$0xff]
        %v467 = vld [vmem:[%s4 + $0x18] sm:$0xff]
        %v468 = vld [vmem:[%s4 + $0x20] sm:$0xff]
        %v469 = vld [vmem:[%s4 + $0x28] sm:$0xff]
        %v470 = vld [vmem:[%s4 + $0x30] sm:$0xff]
        %v471 = vld [vmem:[%s4 + $0x38] sm:$0xff]
        %v472 = vld [vmem:[%s5] sm:$0x1]
        %v474 = vperm.slane %v472, 0
        %vm476 = vcmask 523264
        %v478 = vsel %vm476, %v462, 0
        %v481 = vsel %vm476, %v463, 0
        %483 = vmatpush.msra.mxu0 0.0
        %484 = vmatpush.msra.mxu0 0.0
        %485 = vmatpush.msra.mxu0 0.0
        %486 = vmatpush.msra.mxu0 0.0
        %487 = vmatpush.msra.mxu0 0.0
        %488 = vmatpush.msra.mxu0 0.0
        %489 = vmatpush.msra.mxu0 0.0
        %490 = vmatpush.msra.mxu0 0.0
        %491 = vmatpush.msra.mxu0 %v471
        %492 = vmatpush.msra.mxu0 %v470
        %493 = vmatpush.msra.mxu0 %v469
        %494 = vmatpush.msra.mxu0 %v468
        %495 = vmatpush.msra.mxu0 %v467
        %496 = vmatpush.msra.mxu0 %v466
        %497 = vmatpush.msra.mxu0 %v465
        %498 = vmatpush.msra.mxu0 %v464
        %499 = vmatmul.f32.gmra.mxu0 %v478
        %v500 = vpop.f32.mrf.mxu0
        %v501 = vadd.f32 %v474, %v500
        %502 = vmatmul.f32.gmra.mxu0 %v481
        %v503 = vpop.f32.mrf.mxu0
        %v504 = vadd.f32 %v474, %v503
        %505 = vdwg.mxu0
        %vm506 = vcmp.gt.f32.partialorder %v501, 0.0
        %vm507 = vcmp.gt.f32.partialorder %v504, 0.0
        %v508 = vmul.f32 %v501, 0.02
        %v509 = vmul.f32 %v504, 0.02
        %v510 = vsel %vm506, %v501, %v508
        %v511 = vsel %vm507, %v504, %v509
        %v512 = vld [vmem:[%s6] sm:$0xff]
        %v513 = vld [vmem:[%s6 + $0x8] sm:$0xff]
        %v514 = vld [vmem:[%s7] sm:$0x1]
        %v516 = vperm.slane %v514, 0
        %v519 = vsel %vm415, %v510, 0
        %v522 = vsel %vm415, %v511, 0
        %524 = vmatpush.msra.mxu0 0.0
        %525 = vmatpush.msra.mxu0 0.0
        %526 = vmatpush.msra.mxu0 0.0
        %527 = vmatpush.msra.mxu0 0.0
        %528 = vmatpush.msra.mxu0 0.0
        %529 = vmatpush.msra.mxu0 0.0
        %530 = vmatpush.msra.mxu0 0.0
        %531 = vmatpush.msra.mxu0 0.0
        %532 = vmatpush.msra.mxu0 0.0
        %533 = vmatpush.msra.mxu0 0.0
        %534 = vmatpush.msra.mxu0 0.0
        %535 = vmatpush.msra.mxu0 0.0
        %536 = vmatpush.msra.mxu0 0.0
        %537 = vmatpush.msra.mxu0 0.0
        %538 = vmatpush.msra.mxu0 %v513
        %539 = vmatpush.msra.mxu0 %v512
        %540 = vmatmul.f32.gmra.mxu0 %v519
        %v541 = vpop.f32.mrf.mxu0
        %v542 = vadd.f32 %v516, %v541
        %543 = vmatmul.f32.gmra.mxu0 %v522
        %v544 = vpop.f32.mrf.mxu0
        %v545 = vadd.f32 %v516, %v544
        %546 = vdwg.mxu0
        %vm547 = vcmask 23552
        %v548 = vsel %vm547, %v542, -inf
        %549 = vmax.xlane.f32.xlu0 %v548
        %v550 = vpop.xlane.xlu0 %549
        %v551 = vsel %vm547, %v545, -inf
        %552 = vmax.xlane.f32.xlu0 %v551
        %v553 = vpop.xlane.xlu0 %552
        %v554 = vsub.f32 %v542, %v550
        %v555 = vsub.f32 %v545, %v553
        %v556 = vmul.f32 %v554, 1.442695
        %v557 = vpow.pop %v556
        %v558 = vmul.f32 %v555, 1.442695
        %v559 = vpow.pop %v558
        %v560 = vsel %vm547, %v557, 0.0
        %561 = vadd.xlane.f32.xlu0 %v560
        %v562 = vpop.xlane.xlu0 %561
        %v563 = vsel %vm547, %v559, 0.0
        %564 = vadd.xlane.f32.xlu0 %v563
        %v565 = vpop.xlane.xlu0 %564
        %v566 = vlog2.pop %v562
        %v567 = vmul.f32 %v566, 0.6931472
        %v568 = vlog2.pop %v565
        %v569 = vmul.f32 %v568, 0.6931472
        %v570 = vsub.f32 %v554, %v567
        %v571 = vsub.f32 %v555, %v569
        %572 = vst.msk [vmem:[%s352] sm:$0xff] %vm547, %v570
        %573 = vst.msk [vmem:[%s352 + $0x8] sm:$0xff] %vm547, %v571
      $region60: #{_lambda_.5} parent=51 // pred_fallthru
        _
      %s574 = smul.u32 2, %s23
      %p575 = scmp.lt.s32.totalorder %s574, 5
      %s576 = scalar_select %p575, %s574, 5
      %s577 = smul.addr %s576, 8
      %s578 = scalar_lea.vmem %s8, %s577
      // Predicated region
      $region61: #{_lambda_.5} parent=51 // pred_check
        %p579 = pneg %p229
      $region62: #{_lambda_.5} parent=51 // pred_check_branch
        %581 = sbr.rel (%p579) target = $region64
      $region63: #{_lambda_.5} parent=51 // pred_region
        %s582 = smul.u32 2, %s23
      $region64: #{_lambda_.5} parent=51 // pred_fallthru
        _
    $region52: #{_lambda_.5} parent=5 // pred_fallthru
      _
    %p583 = scmp.le.s32.totalorder 2, %s14
    // Predicated region
    $region65: #{_lambda_.5} parent=5 // pred_check
      %p584 = pneg %p583
    $region66: #{_lambda_.5} parent=5 // pred_check_branch
      %586 = sbr.rel (%p584) target = $region68
    $region67: #{_lambda_.5} parent=5 // pred_region
      %s587 = ssub.s32 %s14, 2
      // Predicated region
      $region69: #{_lambda_.5} parent=67 // pred_check
        %p588 = pneg %p235
      $region70: #{_lambda_.5} parent=67 // pred_check_branch
        %590 = sbr.rel (%p588) target = $region72
      $region71: #{_lambda_.5} parent=67 // pred_region
        %s591 = smul.u32 2, %s25
        %p592 = scmp.lt.s32.totalorder %s591, 5
        %s593 = scalar_select %p592, %s591, 5
        %s594 = smul.addr %s593, 8
        %s595 = scalar_lea.vmem %s8, %s594
      $region72: #{_lambda_.5} parent=67 // pred_fallthru
        _
    $region68: #{_lambda_.5} parent=5 // pred_fallthru
      _
  $region6: #{_lambda_.5} parent=0 // loop_footer
    %s18 = sadd.s32 1, %s14
  $region7: #{_lambda_.5} parent=0 // loop_footer_branch
    %13 = sbr.rel target = $region3
  $region8: #{_lambda_.5} parent=0 // loop_exit
    _

</llo_original>
